<compile_context>
chip_gen: v7x
topology: tpu7x:2x2x1
jax: 0.10.0
libtpu: 0.0.40
codegen_flags: <defaults>
</compile_context>

<pallas_src>
import functools

import jax
import jax.numpy as jnp
from jax import lax
from jax.experimental import pallas as pl
from jax.experimental.pallas import tpu as pltpu


def _ce_kernel(logits_ref, tgt_ref, out_ref, *, num_classes, ts, num_tiles,
               hw_total, hw_padded):
    """One (sample n, pixel-tile j) step: reduced CE sum into an (8,128) block."""
    j = pl.program_id(1)

    t = tgt_ref[0].astype(jnp.int32)                      # (TS, 128) target ids

    # Load each class slab once; C is tiny -> fully unrolled, vreg-dense slabs.
    xs = [logits_ref[0, c].astype(jnp.float32) for c in range(num_classes)]

    m = xs[0]
    for c in range(1, num_classes):
        m = jnp.maximum(m, xs[c])                         # (TS, 128) running max

    s = jnp.zeros_like(m)
    tgt_logit = jnp.zeros_like(m)
    for c in range(num_classes):
        s = s + jnp.exp(xs[c] - m)
        tgt_logit = tgt_logit + jnp.where(t == c, xs[c], 0.0)   # select, no mul

    per_pixel = m + jnp.log(s) - tgt_logit                # (TS, 128) CE per pixel

    def store(vals):
        if ts % 8 == 0:
            # Fold TS sublane-rows -> 8 rows with cheap elementwise adds.
            out_ref[0, 0] = vals.reshape(ts // 8, 8, 128).sum(axis=0)
        else:
            # Tiny-HW case (TS < 8): zero the block, write the TS live rows.
            out_ref[0, 0] = jnp.zeros((8, 128), jnp.float32)
            out_ref[0, 0, 0:ts, :] = vals

    if hw_padded != hw_total:
        tile_hw = ts * 128
        last = num_tiles - 1

        @pl.when(j != last)                               # mask-free fast path
        def _():
            store(per_pixel)

        @pl.when(j == last)                               # ragged tail only
        def _():
            pos = (j * tile_hw
                   + 128 * lax.broadcasted_iota(jnp.int32, (ts, 128), 0)
                   + lax.broadcasted_iota(jnp.int32, (ts, 128), 1))
            store(jnp.where(pos < hw_total, per_pixel, 0.0))
    else:
        store(per_pixel)


def cross_entropy_loss_pallas(predictions, masks, *, vmem_block_bytes=2 << 20):
    """predictions: (N, C, H, W) float; masks: (N, H, W) int. Scalar f32 mean CE."""
    N, C, H, W = predictions.shape
    HW = H * W

    logits = predictions.reshape(N, C, HW)                # free reshape
    targets = masks.reshape(N, HW)
    if jnp.dtype(targets.dtype).itemsize > 4:             # avoid 64-bit refs only
        targets = targets.astype(jnp.int32)

    # ---- pixel tiling: TS 128-lane groups per grid step --------------------
    S = pl.cdiv(HW, 128)                                  # 128-pixel groups
    itemsize = jnp.dtype(logits.dtype).itemsize
    if S <= 8:
        TS = S                                            # tiny input: 1 tile/sample
    else:
        # Cap the logits block (~2 MiB) - safe on v7x's 64 MiB VMEM too.
        max_ts = max(8, (vmem_block_bytes // (C * 128 * itemsize)) // 8 * 8)
        # Keep >= ~4 total grid steps so BlockSpec double-buffering overlaps.
        min_tiles = max(1, pl.cdiv(4, N))
        want_ts = max(8, pl.cdiv(pl.cdiv(S, min_tiles), 8) * 8)
        TS = min(max_ts, want_ts)

    num_tiles = pl.cdiv(S, TS)
    S_pad = num_tiles * TS
    HW_pad = S_pad * 128

    if HW_pad != HW:
        # Only for ragged HW: pad once; padded pixels are masked in-kernel.
        logits = jnp.pad(logits, ((0, 0), (0, 0), (0, HW_pad - HW)))
        targets = jnp.pad(targets, ((0, 0), (0, HW_pad - HW)))

    logits4 = logits.reshape(N, C, S_pad, 128)            # pixels lane+sublane dense
    targets3 = targets.reshape(N, S_pad, 128)

    kernel = functools.partial(_ce_kernel, num_classes=C, ts=TS,
                               num_tiles=num_tiles, hw_total=HW,
                               hw_padded=HW_pad)

    partials = pl.pallas_call(
        kernel,
        out_shape=jax.ShapeDtypeStruct((N, num_tiles, 8, 128), jnp.float32),
        grid_spec=pltpu.PrefetchScalarGridSpec(
            num_scalar_prefetch=0,
            grid=(N, num_tiles),
            in_specs=[
                pl.BlockSpec((1, C, TS, 128), lambda n, j: (n, 0, j, 0)),
                pl.BlockSpec((1, TS, 128), lambda n, j: (n, j, 0)),
            ],
            # Every grid step owns its own (8,128) reduced block -> no residency.
            out_specs=pl.BlockSpec((1, 1, 8, 128), lambda n, j: (n, j, 0, 0)),
        ),
        compiler_params=pltpu.CompilerParams(
            dimension_semantics=("parallel", "parallel"),  # v7x: split N and HW tiles
            vmem_limit_bytes=32 << 20,                     # safe on 64 MiB v7x VMEM
        ),
    )(logits4, targets3)

    # Tiny final reduction + mean in the wrapper (divide by true pixel count).
    return jnp.sum(partials) / jnp.float32(N * HW)


def cross_entropy_loss_ref(predictions, masks):
    """Pure-JAX reference matching torch.nn.CrossEntropyLoss(reduction='mean')."""
    N, C, H, W = predictions.shape
    logits = jnp.transpose(predictions, (0, 2, 3, 1)).reshape(-1, C).astype(jnp.float32)
    tgt = masks.reshape(-1).astype(jnp.int32)
    logp = jax.nn.log_softmax(logits, axis=-1)
    nll = -jnp.take_along_axis(logp, tgt[:, None], axis=-1)[:, 0]
    return jnp.mean(nll)


if __name__ == "__main__":
    key = jax.random.PRNGKey(0)
    k1, k2, k3, k4 = jax.random.split(key, 4)

    # Main test: HW a multiple of 128 -> fully copy-free fast path.
    N, C, H, W = 2, 4, 16, 16
    predictions = jax.random.normal(k1, (N, C, H, W), dtype=jnp.float32)
    masks = jax.random.randint(k2, (N, H, W), 0, C, dtype=jnp.int32)

    loss = cross_entropy_loss_pallas(predictions, masks)
    jax.block_until_ready(loss)
    ref = cross_entropy_loss_ref(predictions, masks)
    assert jnp.allclose(loss, ref, atol=1e-5, rtol=1e-5), (loss, ref)

    # Ragged test: HW not a multiple of 128 -> pad + last-tile mask path.
    H2, W2 = 15, 15
    predictions2 = jax.random.normal(k3, (N, C, H2, W2), dtype=jnp.float32)
    masks2 = jax.random.randint(k4, (N, H2, W2), 0, C, dtype=jnp.int32)
    loss2 = cross_entropy_loss_pallas(predictions2, masks2)
    jax.block_until_ready(loss2)
    ref2 = cross_entropy_loss_ref(predictions2, masks2)
    assert jnp.allclose(loss2, ref2, atol=1e-5, rtol=1e-5), (loss2, ref2)

    # TODO(synk): self.loss_val = loss.item() / show() are host-side Python state,
    # not kernel work; the scalar loss returned here is the forward output.
    print("KERNEL_OK")
</pallas_src>

<mosaic_0001>
module attributes {stable_mosaic.version = 11 : i64} {
  func.func @_ce_kernel(%arg0: i32, %arg1: i32, %arg2: memref<1x4x2x128xf32, #tpu.memory_space<vmem>>, %arg3: memref<1x2x128xi32, #tpu.memory_space<vmem>>, %arg4: memref<1x1x8x128xf32, #tpu.memory_space<vmem>>) attributes {dimension_semantics = [#tpu.dimension_semantics<parallel>, #tpu.dimension_semantics<parallel>], iteration_bounds = array<i64: 2, 1>, scalar_prefetch = 0 : i64, scratch_operands = 0 : i64, tpu.core_type = #tpu.core_type<tc>, window_params = [{transform_indices = @transform_0, window_bounds = array<i64: 1, 4, 2, 128>}, {transform_indices = @transform_1, window_bounds = array<i64: 1, 2, 128>}, {transform_indices = @transform_2, window_bounds = array<i64: 1, 1, 8, 128>}]} {
    %c0 = arith.constant 0 : index
    %c0_0 = arith.constant 0 : index
    %c0_1 = arith.constant 0 : index
    %0 = vector.load %arg3[%c0, %c0_0, %c0_1] : memref<1x2x128xi32, #tpu.memory_space<vmem>>, vector<1x2x128xi32>
    %1 = vector.shape_cast %0 : vector<1x2x128xi32> to vector<2x128xi32>
    %c0_2 = arith.constant 0 : index
    %c0_3 = arith.constant 0 : index
    %c0_4 = arith.constant 0 : index
    %c0_5 = arith.constant 0 : index
    %2 = vector.load %arg2[%c0_2, %c0_3, %c0_4, %c0_5] : memref<1x4x2x128xf32, #tpu.memory_space<vmem>>, vector<1x1x2x128xf32>
    %3 = vector.shape_cast %2 : vector<1x1x2x128xf32> to vector<2x128xf32>
    %c0_6 = arith.constant 0 : index
    %c1 = arith.constant 1 : index
    %c0_7 = arith.constant 0 : index
    %c0_8 = arith.constant 0 : index
    %4 = vector.load %arg2[%c0_6, %c1, %c0_7, %c0_8] : memref<1x4x2x128xf32, #tpu.memory_space<vmem>>, vector<1x1x2x128xf32>
    %5 = vector.shape_cast %4 : vector<1x1x2x128xf32> to vector<2x128xf32>
    %c0_9 = arith.constant 0 : index
    %c2 = arith.constant 2 : index
    %c0_10 = arith.constant 0 : index
    %c0_11 = arith.constant 0 : index
    %6 = vector.load %arg2[%c0_9, %c2, %c0_10, %c0_11] : memref<1x4x2x128xf32, #tpu.memory_space<vmem>>, vector<1x1x2x128xf32>
    %7 = vector.shape_cast %6 : vector<1x1x2x128xf32> to vector<2x128xf32>
    %c0_12 = arith.constant 0 : index
    %c3 = arith.constant 3 : index
    %c0_13 = arith.constant 0 : index
    %c0_14 = arith.constant 0 : index
    %8 = vector.load %arg2[%c0_12, %c3, %c0_13, %c0_14] : memref<1x4x2x128xf32, #tpu.memory_space<vmem>>, vector<1x1x2x128xf32>
    %9 = vector.shape_cast %8 : vector<1x1x2x128xf32> to vector<2x128xf32>
    %10 = arith.maximumf %3, %5 : vector<2x128xf32>
    %11 = arith.maximumf %10, %7 : vector<2x128xf32>
    %12 = arith.maximumf %11, %9 : vector<2x128xf32>
    %cst = arith.constant 0.000000e+00 : f32
    %13 = vector.broadcast %cst : f32 to vector<2x128xf32>
    %cst_15 = arith.constant 0.000000e+00 : f32
    %14 = vector.broadcast %cst_15 : f32 to vector<2x128xf32>
    %15 = arith.subf %3, %12 : vector<2x128xf32>
    %16 = math.exp %15 : vector<2x128xf32>
    %17 = arith.addf %13, %16 : vector<2x128xf32>
    %c0_i32 = arith.constant 0 : i32
    %18 = vector.broadcast %c0_i32 : i32 to vector<2x128xi32>
    %19 = arith.cmpi eq, %1, %18 : vector<2x128xi32>
    %cst_16 = arith.constant 0.000000e+00 : f32
    %20 = vector.broadcast %cst_16 : f32 to vector<2x128xf32>
    %21 = arith.select %19, %3, %20 : vector<2x128xi1>, vector<2x128xf32>
    %22 = arith.addf %14, %21 : vector<2x128xf32>
    %23 = arith.subf %5, %12 : vector<2x128xf32>
    %24 = math.exp %23 : vector<2x128xf32>
    %25 = arith.addf %17, %24 : vector<2x128xf32>
    %c1_i32 = arith.constant 1 : i32
    %26 = vector.broadcast %c1_i32 : i32 to vector<2x128xi32>
    %27 = arith.cmpi eq, %1, %26 : vector<2x128xi32>
    %cst_17 = arith.constant 0.000000e+00 : f32
    %28 = vector.broadcast %cst_17 : f32 to vector<2x128xf32>
    %29 = arith.select %27, %5, %28 : vector<2x128xi1>, vector<2x128xf32>
    %30 = arith.addf %22, %29 : vector<2x128xf32>
    %31 = arith.subf %7, %12 : vector<2x128xf32>
    %32 = math.exp %31 : vector<2x128xf32>
    %33 = arith.addf %25, %32 : vector<2x128xf32>
    %c2_i32 = arith.constant 2 : i32
    %34 = vector.broadcast %c2_i32 : i32 to vector<2x128xi32>
    %35 = arith.cmpi eq, %1, %34 : vector<2x128xi32>
    %cst_18 = arith.constant 0.000000e+00 : f32
    %36 = vector.broadcast %cst_18 : f32 to vector<2x128xf32>
    %37 = arith.select %35, %7, %36 : vector<2x128xi1>, vector<2x128xf32>
    %38 = arith.addf %30, %37 : vector<2x128xf32>
    %39 = arith.subf %9, %12 : vector<2x128xf32>
    %40 = math.exp %39 : vector<2x128xf32>
    %41 = arith.addf %33, %40 : vector<2x128xf32>
    %c3_i32 = arith.constant 3 : i32
    %42 = vector.broadcast %c3_i32 : i32 to vector<2x128xi32>
    %43 = arith.cmpi eq, %1, %42 : vector<2x128xi32>
    %cst_19 = arith.constant 0.000000e+00 : f32
    %44 = vector.broadcast %cst_19 : f32 to vector<2x128xf32>
    %45 = arith.select %43, %9, %44 : vector<2x128xi1>, vector<2x128xf32>
    %46 = arith.addf %38, %45 : vector<2x128xf32>
    %47 = math.log %41 : vector<2x128xf32>
    %48 = arith.addf %12, %47 : vector<2x128xf32>
    %49 = arith.subf %48, %46 : vector<2x128xf32>
    %cst_20 = arith.constant 0.000000e+00 : f32
    %50 = vector.broadcast %cst_20 : f32 to vector<8x128xf32>
    %c0_21 = arith.constant 0 : index
    %c0_22 = arith.constant 0 : index
    %c0_23 = arith.constant 0 : index
    %c0_24 = arith.constant 0 : index
    %51 = vector.load %arg4[%c0_21, %c0_22, %c0_23, %c0_24] : memref<1x1x8x128xf32, #tpu.memory_space<vmem>>, vector<1x1x8x128xf32>
    %52 = vector.shape_cast %51 : vector<1x1x8x128xf32> to vector<8x128xf32>
    %53 = vector.shape_cast %50 : vector<8x128xf32> to vector<1x1x8x128xf32>
    tpu.vector_store %arg4[%c0_21, %c0_22, %c0_23, %c0_24], %53 {strides = array<i32>} : memref<1x1x8x128xf32, #tpu.memory_space<vmem>>, vector<1x1x8x128xf32>,
    %c0_25 = arith.constant 0 : index
    %c0_26 = arith.constant 0 : index
    %c0_27 = arith.constant 0 : index
    %c0_28 = arith.constant 0 : index
    %54 = vector.load %arg4[%c0_25, %c0_26, %c0_27, %c0_28] : memref<1x1x8x128xf32, #tpu.memory_space<vmem>>, vector<1x1x2x128xf32>
    %55 = vector.shape_cast %54 : vector<1x1x2x128xf32> to vector<2x128xf32>
    %56 = vector.shape_cast %49 : vector<2x128xf32> to vector<1x1x2x128xf32>
    tpu.vector_store %arg4[%c0_25, %c0_26, %c0_27, %c0_28], %56 {strides = array<i32>} : memref<1x1x8x128xf32, #tpu.memory_space<vmem>>, vector<1x1x2x128xf32>,
    return
  }
  func.func @transform_0(%arg0: i32, %arg1: i32) -> (i32, i32, i32, i32) {
    %c0_i32 = arith.constant 0 : i32
    %c0_i32_0 = arith.constant 0 : i32
    %c0_i32_1 = arith.constant 0 : i32
    return %arg0, %c0_i32, %arg1, %c0_i32_0 : i32, i32, i32, i32
  }
  func.func @transform_1(%arg0: i32, %arg1: i32) -> (i32, i32, i32) {
    %c0_i32 = arith.constant 0 : i32
    %c0_i32_0 = arith.constant 0 : i32
    return %arg0, %arg1, %c0_i32 : i32, i32, i32
  }
  func.func @transform_2(%arg0: i32, %arg1: i32) -> (i32, i32, i32, i32) {
    %c0_i32 = arith.constant 0 : i32
    %c0_i32_0 = arith.constant 0 : i32
    %c0_i32_1 = arith.constant 0 : i32
    return %arg0, %arg1, %c0_i32, %c0_i32_0 : i32, i32, i32, i32
  }
}

</mosaic_0001>

<llo_original>
// kernel: tpu_custom_call.1
$region0: #{tpu_custom_call.1}
  #allocation0 [shape = 'u32[]', space=smem, size = 0x4, offset = 0x4, fixed_abs, tag = 'smem constant byte address 0x4 - core index']
  #allocation1 [shape = 'u32[144,128]{1,0:T(1,128)}', space=vmem, size = 0x12000, scoped, tag = 'internal scratch']
  %s0 = inlined_call_operand.hbm [shape: f32[2,4,2,128], index: 0, kind: input, shape index: {}]
  %s1 = inlined_call_operand.hbm [shape: s32[2,2,128], index: 1, kind: input, shape index: {}]
  %s2 = inlined_call_operand.hbm [shape: f32[2,1,8,128], index: 2, kind: output, shape index: {}]
  %s3 = sld [smem:[#allocation0]]
  $region49: #{tpu_custom_call.1} parent=0
    _
  %s5 = ssub.s32 1, %s3
  %s6 = scalar_select 0, %s5, %s3
  $region1: #{tpu_custom_call.1} parent=0
    #allocation2 [shape = 'u8[8192]{0}', space=vmem, size = 0x2000, scoped, tag = 'input window, operand 0']
    #allocation3 [shape = 's32[2]{0}', space=sflag, size = 0x8, scoped, tag = 'scoped memory for tpu_custom_call.1']
    #allocation4 [shape = 's32[2]{0}', space=sflag, size = 0x8, scoped, tag = 'scoped memory for tpu_custom_call.1']
    #allocation5 [shape = 'u8[2048]{0}', space=vmem, size = 0x800, scoped, tag = 'input window, operand 1']
    #allocation6 [shape = 's32[2]{0}', space=sflag, size = 0x8, scoped, tag = 'scoped memory for tpu_custom_call.1']
    #allocation7 [shape = 'u8[8192]{0}', space=vmem, size = 0x2000, scoped, tag = 'output window, operand 0']
    %7 = vsyncpa [#allocation3], 0
    %s8 = scalar_lea.sflag [#allocation3], 1
    %9 = vsyncpa %s8, 0
    %10 = vsyncpa [#allocation6], 0
    %s11 = scalar_lea.sflag [#allocation6], 1
    %12 = vsyncpa %s11, 0
    %13 = vsyncpa [#allocation4], 0
    %s14 = scalar_lea.sflag [#allocation4], 1
    %15 = vsyncpa %s14, 0
    loop: start=0, step=1, limit=4
    $region2: #{tpu_custom_call.1} parent=1 // loop_pre_header
      _
    $region3: #{tpu_custom_call.1} parent=1 // loop_header
      %s17 = sphi 0, %s21
      %p18 = scmp.ge.s32.totalorder %s17, 4
      %s24 = sphi 0, %s36
      %s25 = sphi 0, %s32
      %s26 = sphi 0, %s24
      %s27 = sphi 0, %s25
      %s28 = sphi 0, %s26
      %s29 = sphi 0, %s27
      %s41 = sphi 0, %s43
      %s44 = sphi 0, %s41
      %s45 = sphi 0, %s44
      %s61 = sphi 0, %s45
      %s69 = sphi 0, %s71
      %s72 = sphi 0, %s69
      %s73 = sphi 0, %s72
      %s89 = sphi 0, %s73
      %s97 = sphi 0, %s99
      %s100 = sphi 0, %s97
      %s101 = sphi 0, %s100
      %s117 = sphi 0, %s101
    $region4: #{tpu_custom_call.1} parent=1 // loop_header_branch
      %20 = sbr.rel (%p18) target = $region8
    $region5: #{tpu_custom_call.1} parent=1 // loop_body
      %s22 = ssub.s32 %s17, 1
      %s23 = ssub.s32 %s17, 2
      %s30 = sadd.s32 1, %s25
      %p31 = scmp.ge.s32.totalorder %s30, 1
      %s32 = scalar_select %p31, 0, %s30
      %s33 = sadd.s32 1, %s24
      %s34 = scalar_select %p31, %s33, %s24
      %p35 = scmp.ge.s32.totalorder %s34, 2
      %s36 = scalar_select %p35, 0, %s34
      %s37 = ssub.s32 %s24, %s36
      %s38 = ssub.s32 %s25, %s32
      %s39 = sor.u32 %s37, %s38
      %p40 = scmp.eq.s32.totalorder %s39, 0
      %s42 = sadd.s32 %s41, 1
      %s43 = scalar_select %p40, %s41, %s42
      %p46 = pneg %p40
      %p47 = scmp.eq.s32.totalorder %s17, 1
      %p48 = por %p46, %p47
      %p49 = scmp.ne.s32.totalorder %s41, %s44
      %p50 = scmp.eq.s32.totalorder %s17, 0
      %p51 = por %p49, %p50
      %p52 = scmp.ne.s32.totalorder %s41, %s44
      %p53 = scmp.eq.s32.totalorder %s22, 1
      %p54 = por %p52, %p53
      %p55 = scmp.ne.s32.totalorder %s44, %s45
      %p56 = scmp.eq.s32.totalorder %s22, 0
      %p57 = por %p55, %p56
      %p58 = scmp.ne.s32.totalorder %s44, %s45
      %p59 = scmp.eq.s32.totalorder %s23, 1
      %p60 = por %p58, %p59
      %p62 = scmp.ne.s32.totalorder %s45, %s61
      %p63 = scmp.eq.s32.totalorder %s23, 0
      %p64 = por %p62, %p63
      %s65 = ssub.s32 %s24, %s36
      %s66 = ssub.s32 %s25, %s32
      %s67 = sor.u32 %s65, %s66
      %p68 = scmp.eq.s32.totalorder %s67, 0
      %s70 = sadd.s32 %s69, 1
      %s71 = scalar_select %p68, %s69, %s70
      %p74 = pneg %p68
      %p75 = scmp.eq.s32.totalorder %s17, 1
      %p76 = por %p74, %p75
      %p77 = scmp.ne.s32.totalorder %s69, %s72
      %p78 = scmp.eq.s32.totalorder %s17, 0
      %p79 = por %p77, %p78
      %p80 = scmp.ne.s32.totalorder %s69, %s72
      %p81 = scmp.eq.s32.totalorder %s22, 1
      %p82 = por %p80, %p81
      %p83 = scmp.ne.s32.totalorder %s72, %s73
      %p84 = scmp.eq.s32.totalorder %s22, 0
      %p85 = por %p83, %p84
      %p86 = scmp.ne.s32.totalorder %s72, %s73
      %p87 = scmp.eq.s32.totalorder %s23, 1
      %p88 = por %p86, %p87
      %p90 = scmp.ne.s32.totalorder %s73, %s89
      %p91 = scmp.eq.s32.totalorder %s23, 0
      %p92 = por %p90, %p91
      %s93 = ssub.s32 %s24, %s36
      %s94 = ssub.s32 %s25, %s32
      %s95 = sor.u32 %s93, %s94
      %p96 = scmp.eq.s32.totalorder %s95, 0
      %s98 = sadd.s32 %s97, 1
      %s99 = scalar_select %p96, %s97, %s98
      %p102 = pneg %p96
      %p103 = scmp.eq.s32.totalorder %s17, 1
      %p104 = por %p102, %p103
      %p105 = scmp.ne.s32.totalorder %s97, %s100
      %p106 = scmp.eq.s32.totalorder %s17, 0
      %p107 = por %p105, %p106
      %p108 = scmp.ne.s32.totalorder %s97, %s100
      %p109 = scmp.eq.s32.totalorder %s22, 1
      %p110 = por %p108, %p109
      %p111 = scmp.ne.s32.totalorder %s100, %s101
      %p112 = scmp.eq.s32.totalorder %s22, 0
      %p113 = por %p111, %p112
      %p114 = scmp.ne.s32.totalorder %s100, %s101
      %p115 = scmp.eq.s32.totalorder %s23, 1
      %p116 = por %p114, %p115
      %p118 = scmp.ne.s32.totalorder %s101, %s117
      %p119 = scmp.eq.s32.totalorder %s23, 0
      %p120 = por %p118, %p119
      %p121 = scmp.le.s32.totalorder 1, %s17
      %p122 = scmp.lt.s32.totalorder %s17, 3
      %p123 = pnand %p121, %p122
      %p124 = pneg %p123
      // Predicated region
      $region9: #{tpu_custom_call.1} parent=5 // pred_check
        _
      $region10: #{tpu_custom_call.1} parent=5 // pred_check_branch
        %126 = sbr.rel (%p123) target = $region12
      $region11: #{tpu_custom_call.1} parent=5 // pred_region
        %s127 = ssub.s32 %s17, 1
      $region12: #{tpu_custom_call.1} parent=5 // pred_fallthru
        _
      %p128 = scmp.lt.s32.totalorder %s17, 2
      // Predicated region
      $region13: #{tpu_custom_call.1} parent=5 // pred_check
        %p129 = pneg %p128
      $region14: #{tpu_custom_call.1} parent=5 // pred_check_branch
        %131 = sbr.rel (%p129) target = $region16
      $region15: #{tpu_custom_call.1} parent=5 // pred_region
        // Predicated region
        $region17: #{tpu_custom_call.1} parent=15 // pred_check
          %p132 = pneg %p51
        $region18: #{tpu_custom_call.1} parent=15 // pred_check_branch
          %134 = sbr.rel (%p132) target = $region20
        $region19: #{tpu_custom_call.1} parent=15 // pred_region
          %s135 = sand.u32 %s41, 1
          %s136 = scalar_lea.sflag [#allocation3], %s135
          %s137 = sand.u32 %s41, 1
          %s138 = smul.addr %s137, 8
          %s139 = scalar_lea.vmem [#allocation2], %s138
          %s141 = ssub.s32 128, 128
          %142 = vsyncadd %s136, %s141
          %s143 = smul.addr %s24, 4
          %s144 = sadd.s32 %s25, %s143
          %s145 = smul.addr %s144, 32
          %s146 = scalar_lea.hbm %s0, %s145
          %s147 = sshll.u32 %s139, 4
          %s148 = int_to_ptr.vmem [resolvable:$true] %s147
          %153 = dma.hbm_to_vmem [thread:$0]  %s146, 128, %s148, %s136, 32, 32, 2
        $region20: #{tpu_custom_call.1} parent=15 // pred_fallthru
          _
        // Predicated region
        $region21: #{tpu_custom_call.1} parent=15 // pred_check
          %p154 = pneg %p79
        $region22: #{tpu_custom_call.1} parent=15 // pred_check_branch
          %156 = sbr.rel (%p154) target = $region24
        $region23: #{tpu_custom_call.1} parent=15 // pred_region
          %s157 = sand.u32 %s69, 1
          %s158 = scalar_lea.sflag [#allocation6], %s157
          %s159 = sand.u32 %s69, 1
          %s160 = smul.addr %s159, 2
          %s161 = scalar_lea.vmem [#allocation5], %s160
          %s163 = ssub.s32 32, 32
          %164 = vsyncadd %s158, %s163
          %s165 = sadd.s32 %s25, %s24
          %s166 = smul.addr %s165, 32
          %s167 = scalar_lea.hbm %s1, %s166
          %s169 = sshll.u32 %s161, 4
          %s170 = int_to_ptr.vmem [resolvable:$true] %s169
          %172 = dma.hbm_to_vmem [thread:$0]  %s167, 32, %s170, %s158
        $region24: #{tpu_custom_call.1} parent=15 // pred_fallthru
          _
      $region16: #{tpu_custom_call.1} parent=5 // pred_fallthru
        _
      %p173 = scmp.le.s32.totalorder 1, %s17
      %p174 = scmp.lt.s32.totalorder %s17, 3
      %p175 = pnand %p173, %p174
      %p176 = pneg %p175
      // Predicated region
      $region25: #{tpu_custom_call.1} parent=5 // pred_check
        _
      $region26: #{tpu_custom_call.1} parent=5 // pred_check_branch
        %178 = sbr.rel (%p175) target = $region28
      $region27: #{tpu_custom_call.1} parent=5 // pred_region
        %s179 = ssub.s32 %s17, 1
        %s180 = sand.u32 %s44, 1
        %s181 = scalar_lea.sflag [#allocation3], %s180
        %s182 = sand.u32 %s44, 1
        %s183 = smul.addr %s182, 8
        %s184 = scalar_lea.vmem [#allocation2], %s183
        // Predicated region
        $region29: #{tpu_custom_call.1} parent=27 // pred_check
          %p185 = pneg %p57
        $region30: #{tpu_custom_call.1} parent=27 // pred_check_branch
          %187 = sbr.rel (%p185) target = $region32
        $region31: #{tpu_custom_call.1} parent=27 // pred_region
          %188 = dma.done %s181, 128
        $region32: #{tpu_custom_call.1} parent=27 // pred_fallthru
          _
        %s189 = sand.u32 %s72, 1
        %s190 = scalar_lea.sflag [#allocation6], %s189
        %s191 = sand.u32 %s72, 1
        %s192 = smul.addr %s191, 2
        %s193 = scalar_lea.vmem [#allocation5], %s192
        // Predicated region
        $region33: #{tpu_custom_call.1} parent=27 // pred_check
          %p194 = pneg %p85
        $region34: #{tpu_custom_call.1} parent=27 // pred_check_branch
          %196 = sbr.rel (%p194) target = $region36
        $region35: #{tpu_custom_call.1} parent=27 // pred_region
          %197 = dma.done %s190, 32
        $region36: #{tpu_custom_call.1} parent=27 // pred_fallthru
          _
        %s198 = sand.u32 %s44, 1
        %s199 = scalar_lea.sflag [#allocation3], %s198
        %s200 = sand.u32 %s44, 1
        %s201 = smul.addr %s200, 8
        %s202 = scalar_lea.vmem [#allocation2], %s201
        %p203 = pneg %p57
        %p204 = pneg %p54
        %s205 = sand.u32 %s72, 1
        %s206 = scalar_lea.sflag [#allocation6], %s205
        %s207 = sand.u32 %s72, 1
        %s208 = smul.addr %s207, 2
        %s209 = scalar_lea.vmem [#allocation5], %s208
        %p210 = pneg %p85
        %p211 = pneg %p82
        %p212 = pneg %p113
        %p213 = pneg %p110
        %s214 = sand.u32 %s100, 1
        %s215 = scalar_lea.sflag [#allocation4], %s214
        %s216 = sand.u32 %s100, 1
        %s217 = smul.addr %s216, 8
        %s218 = scalar_lea.vmem [#allocation7], %s217
        %v219 = vld [vmem:[%s193] sm:$0x3]
        %v220 = vld [vmem:[%s184] sm:$0x3]
        %s221 = scalar_lea.vmem %s184, 2 [#allocation2]
        %v222 = vld [vmem:[%s221] sm:$0x3]
        %s223 = scalar_lea.vmem %s184, 4 [#allocation2]
        %v224 = vld [vmem:[%s223] sm:$0x3]
        %s225 = scalar_lea.vmem %s184, 6 [#allocation2]
        %v226 = vld [vmem:[%s225] sm:$0x3]
        %v227 = vmax.f32 %v220, %v222
        %v228 = vmax.f32 %v227, %v224
        %v229 = vmax.f32 %v228, %v226
        %v230 = vsub.f32 %v220, %v229
        %v231 = vmul.f32 %v230, 1.442695
        %v232 = vpow.pop %v231
        %v233 = vadd.f32 %v232, 0.0
        %vm234 = vcmp.eq.s32.totalorder %v219, 0
        %v235 = vsel %vm234, %v220, 0.0
        %v236 = vadd.f32 %v235, 0.0
        %v237 = vsub.f32 %v222, %v229
        %v238 = vmul.f32 %v237, 1.442695
        %v239 = vpow.pop %v238
        %v240 = vadd.f32 %v233, %v239
        %vm241 = vcmp.eq.s32.totalorder %v219, 1
        %v242 = vsel %vm241, %v222, 0.0
        %v243 = vadd.f32 %v236, %v242
        %v244 = vsub.f32 %v224, %v229
        %v245 = vmul.f32 %v244, 1.442695
        %v246 = vpow.pop %v245
        %v247 = vadd.f32 %v240, %v246
        %vm248 = vcmp.eq.s32.totalorder %v219, 2
        %v249 = vsel %vm248, %v224, 0.0
        %v250 = vadd.f32 %v243, %v249
        %v251 = vsub.f32 %v226, %v229
        %v252 = vmul.f32 %v251, 1.442695
        %v253 = vpow.pop %v252
        %v254 = vadd.f32 %v247, %v253
        %vm255 = vcmp.eq.s32.totalorder %v219, 3
        %v256 = vsel %vm255, %v226, 0.0
        %v257 = vadd.f32 %v250, %v256
        %v258 = vlog2.pop %v254
        %v259 = vmul.f32 %v258, 0.6931472
        %v260 = vadd.f32 %v229, %v259
        %v261 = vsub.f32 %v260, %v257
        %262 = vst [vmem:[%s218] sm:$0xff] 0.0
        %263 = vst [vmem:[%s218] sm:$0x3] %v261
        %s264 = sand.u32 %s100, 1
        %s265 = scalar_lea.sflag [#allocation4], %s264
        %s266 = sand.u32 %s100, 1
        %s267 = smul.addr %s266, 8
        %s268 = scalar_lea.vmem [#allocation7], %s267
        // Predicated region
        $region37: #{tpu_custom_call.1} parent=27 // pred_check
          %p269 = pneg %p110
        $region38: #{tpu_custom_call.1} parent=27 // pred_check_branch
          %271 = sbr.rel (%p269) target = $region40
        $region39: #{tpu_custom_call.1} parent=27 // pred_region
          %s273 = ssub.s32 128, 128
          %274 = vsyncadd %s265, %s273
          %s275 = sadd.s32 %s27, %s26
          %s276 = smul.addr %s275, 128
          %s277 = scalar_lea.hbm %s2, %s276
          %s279 = sshll.u32 %s268, 4
          %s280 = int_to_ptr.vmem [resolvable:$true] %s279
          %282 = dma.vmem_to_hbm [thread:$0]  %s280, 128, %s277, %s265
        $region40: #{tpu_custom_call.1} parent=27 // pred_fallthru
          _
      $region28: #{tpu_custom_call.1} parent=5 // pred_fallthru
        _
      %p283 = scmp.le.s32.totalorder 2, %s17
      // Predicated region
      $region41: #{tpu_custom_call.1} parent=5 // pred_check
        %p284 = pneg %p283
      $region42: #{tpu_custom_call.1} parent=5 // pred_check_branch
        %286 = sbr.rel (%p284) target = $region44
      $region43: #{tpu_custom_call.1} parent=5 // pred_region
        %s287 = ssub.s32 %s17, 2
        // Predicated region
        $region45: #{tpu_custom_call.1} parent=43 // pred_check
          %p288 = pneg %p116
        $region46: #{tpu_custom_call.1} parent=43 // pred_check_branch
          %290 = sbr.rel (%p288) target = $region48
        $region47: #{tpu_custom_call.1} parent=43 // pred_region
          %s291 = sand.u32 %s101, 1
          %s292 = scalar_lea.sflag [#allocation4], %s291
          %s293 = sand.u32 %s101, 1
          %s294 = smul.addr %s293, 8
          %s295 = scalar_lea.vmem [#allocation7], %s294
          %296 = dma.done %s292, 128
        $region48: #{tpu_custom_call.1} parent=43 // pred_fallthru
          _
      $region44: #{tpu_custom_call.1} parent=5 // pred_fallthru
        _
    $region6: #{tpu_custom_call.1} parent=1 // loop_footer
      %s21 = sadd.s32 1, %s17
    $region7: #{tpu_custom_call.1} parent=1 // loop_footer_branch
      %16 = sbr.rel target = $region3
    $region8: #{tpu_custom_call.1} parent=1 // loop_exit
      _
    %297 = vsyncpa [#allocation3], 1
    %s298 = scalar_lea.sflag [#allocation3], 1
    %299 = vsyncpa %s298, 1
    %300 = vsyncpa [#allocation6], 1
    %s301 = scalar_lea.sflag [#allocation6], 1
    %302 = vsyncpa %s301, 1
    %303 = vsyncpa [#allocation4], 1
    %s304 = scalar_lea.sflag [#allocation4], 1
    %305 = vsyncpa %s304, 1

</llo_original>
